<compile_context>
chip_gen: v7x
topology: tpu7x:2x2x1
jax: 0.10.0
libtpu: 0.0.40
codegen_flags: <defaults>
</compile_context>

<pallas_src>
import functools

import jax
import jax.numpy as jnp
import numpy as np
from jax.experimental import pallas as pl
from jax.experimental.pallas import tpu as pltpu


def _masked_softplus(x, valid):
    # Explicit zeroing of padded rows (robust vs. relying on softplus underflow).
    return jnp.where(valid, jax.nn.softplus(x), 0.0)


# ----------------------------------------------------------------------------
# Monolithic kernel: whole (C, N) per batch, Bt batches per grid step.
# ----------------------------------------------------------------------------
def _pam_fused_kernel(x_ref, w_ref, b_ref, gamma_ref, o_ref, *,
                      bt, m_pad, m_valid, channels, eps):
    gamma = gamma_ref[0]
    valid = jax.lax.broadcasted_iota(jnp.int32, (m_pad, 1), 0) < m_valid

    def one_batch(b):
        x = x_ref[b]                                    # (C, N) f32 (residual path)
        x_bf = x.astype(jnp.bfloat16)                   # free VPU cast; MXU gets bf16
        proj = jnp.dot(w_ref[...], x_bf,
                       preferred_element_type=jnp.float32) + b_ref[...]   # (P, N) f32
        q = _masked_softplus(proj[0:m_pad], valid)                        # (Mpad, N)
        k = _masked_softplus(proj[m_pad:2 * m_pad], valid)                # (Mpad, N)
        v = proj[2 * m_pad:2 * m_pad + channels]                          # (C, N)

        # kv[c, m] = sum_n v[c, n] k[m, n].  Only the small k operand is
        # rhs-transposed; the (C, Mpad) result keeps the next dot MXU-native.
        kv = jax.lax.dot_general(v, k, (((1,), (1,)), ((), ())),
                                 preferred_element_type=jnp.float32)      # (C, Mpad)
        ksum = jnp.sum(k, axis=1, keepdims=True) + eps                    # (Mpad, 1)
        denom = jnp.sum(q * ksum, axis=0, keepdims=True)                  # (1, N)
        inv = pl.reciprocal(denom, approx=True)                           # EUP
        inv = inv * (2.0 - denom * inv)                                   # Newton step
        num = jax.lax.dot_general(kv, q, (((1,), (0,)), ((), ())),
                                  preferred_element_type=jnp.float32)     # (C, N)
        o_ref[b] = (x + gamma * (num * inv)).astype(o_ref.dtype)

    if bt == 1:
        one_batch(0)
    else:
        def body(b, carry):
            one_batch(b)
            return carry
        jax.lax.fori_loop(0, bt, body, 0)


# ----------------------------------------------------------------------------
# N-tiled two-pass kernels (large C*N: v7x 64 MiB VMEM / big feature maps).
# ----------------------------------------------------------------------------
def _pam_pass1_kernel(x_ref, w_ref, b_ref, kv_ref, ksum_ref, *,
                      m_pad, m_valid, channels):
    @pl.when(pl.program_id(1) == 0)
    def _():
        kv_ref[...] = jnp.zeros_like(kv_ref)
        ksum_ref[...] = jnp.zeros_like(ksum_ref)

    valid = jax.lax.broadcasted_iota(jnp.int32, (m_pad, 1), 0) < m_valid
    x_bf = x_ref[0].astype(jnp.bfloat16)                                  # (C, Nt)
    proj = jnp.dot(w_ref[...], x_bf,
                   preferred_element_type=jnp.float32) + b_ref[...]       # (Mpad+C, Nt)
    k = _masked_softplus(proj[0:m_pad], valid)                            # (Mpad, Nt)
    v = proj[m_pad:m_pad + channels]                                      # (C, Nt)
    kv_ref[0] = kv_ref[0] + jax.lax.dot_general(
        v, k, (((1,), (1,)), ((), ())), preferred_element_type=jnp.float32)
    ksum_ref[0] = ksum_ref[0] + jnp.sum(k, axis=1, keepdims=True)


def _pam_pass2_kernel(x_ref, w_ref, b_ref, kv_ref, ksum_ref, gamma_ref, o_ref, *,
                      m_pad, m_valid, eps):
    gamma = gamma_ref[0]
    valid = jax.lax.broadcasted_iota(jnp.int32, (m_pad, 1), 0) < m_valid
    x = x_ref[0]                                                          # (C, Nt) f32
    x_bf = x.astype(jnp.bfloat16)
    proj = jnp.dot(w_ref[...], x_bf,
                   preferred_element_type=jnp.float32) + b_ref[...]       # (Mpad, Nt)
    q = _masked_softplus(proj, valid)
    ksum = ksum_ref[0] + eps                                              # (Mpad, 1)
    denom = jnp.sum(q * ksum, axis=0, keepdims=True)                      # (1, Nt)
    inv = pl.reciprocal(denom, approx=True)
    inv = inv * (2.0 - denom * inv)
    num = jax.lax.dot_general(kv_ref[0], q, (((1,), (0,)), ((), ())),
                              preferred_element_type=jnp.float32)         # (C, Nt)
    o_ref[0] = (x + gamma * (num * inv)).astype(o_ref.dtype)


# ----------------------------------------------------------------------------
# Wrapper
# ----------------------------------------------------------------------------
def _vmem_capacity_bytes():
    try:
        return int(pltpu.get_tpu_info().vmem_capacity_bytes)
    except Exception:
        return 64 << 20   # conservative: v7x per-TensorCore VMEM


def pam_module_pallas(x_nchw, params, *, eps=1e-6, out_dtype=None,
                      force_tiled=False, tile_n=None):
    """x_nchw: (B, C, W, H) float32.  params: dict of conv weights/biases + gamma."""
    B, C, W, H = x_nchw.shape
    N = W * H
    M = params["wq"].shape[0]
    m_pad = max(8, ((M + 7) // 8) * 8)               # sublane-aligned q/k segment
    out_dtype = jnp.dtype(out_dtype or x_nchw.dtype)
    out_isz = out_dtype.itemsize

    x = x_nchw.reshape(B, C, N).astype(jnp.float32)  # NO wrapper-side bf16 cast
    gamma = params["gamma"].reshape(1).astype(jnp.float32)

    cap = _vmem_capacity_bytes()
    budget = cap - (12 << 20)                        # headroom for compiler scratch

    P = 2 * m_pad + C

    def mono_need(bt):
        blk = bt * C * N * (4 + out_isz)             # one in + one out block
        w_bytes = P * C * 2 + P * 4
        inter = (P + 2 * m_pad + 2 * C) * N * 4 + C * N * 2 + C * m_pad * 4 + 8 * N
        return 2 * blk + 2 * w_bytes + inter

    use_tiled = force_tiled or mono_need(1) > budget

    if not use_tiled:
        # ---- monolithic (C, N) blocks; Bt batches per grid step ----------------
        min_steps = min(B, 4)                        # >= 2 steps/core on 2-core v7x
        bt = 1
        for d in range(1, B + 1):
            if B % d == 0 and B // d >= min_steps and mono_need(d) <= budget:
                bt = d

        w_all = jnp.zeros((P, C), jnp.float32)
        w_all = w_all.at[0:M].set(params["wq"])
        w_all = w_all.at[m_pad:m_pad + M].set(params["wk"])
        w_all = w_all.at[2 * m_pad:2 * m_pad + C].set(params["wv"])
        b_all = jnp.zeros((P, 1), jnp.float32)
        b_all = b_all.at[0:M, 0].set(params["bq"])
        b_all = b_all.at[m_pad:m_pad + M, 0].set(params["bk"])
        b_all = b_all.at[2 * m_pad:2 * m_pad + C, 0].set(params["bv"])
        w_all = w_all.astype(jnp.bfloat16)

        kernel = functools.partial(_pam_fused_kernel, bt=bt, m_pad=m_pad,
                                   m_valid=M, channels=C, eps=eps)

        flops = B * (2 * P * C * N + 4 * C * m_pad * N + 10 * C * N)
        transc = B * (2 * m_pad * N + 2 * N)
        bytes_acc = B * C * N * (4 + out_isz) + P * C * 2 + P * 4 + 4
        vmem_limit = int(min(cap - (8 << 20), mono_need(bt) + (16 << 20)))

        out = pl.pallas_call(
            kernel,
            out_shape=jax.ShapeDtypeStruct((B, C, N), out_dtype),
            grid_spec=pltpu.PrefetchScalarGridSpec(
                num_scalar_prefetch=0,
                grid=(B // bt,),
                in_specs=[
                    pl.BlockSpec((bt, C, N), lambda i: (i, 0, 0)),        # x (f32)
                    pl.BlockSpec((P, C), lambda i: (0, 0)),               # fused W (bf16)
                    pl.BlockSpec((P, 1), lambda i: (0, 0)),               # fused bias (f32)
                    pl.BlockSpec(memory_space=pltpu.MemorySpace.SMEM),    # gamma
                ],
                out_specs=pl.BlockSpec((bt, C, N), lambda i: (i, 0, 0)),
            ),
            compiler_params=pltpu.CompilerParams(
                dimension_semantics=("parallel",),
                vmem_limit_bytes=vmem_limit),
            cost_estimate=pl.CostEstimate(flops=flops, transcendentals=transc,
                                          bytes_accessed=bytes_acc),
        )(x, w_all, b_all, gamma)
        return out.reshape(B, C, W, H)

    # ---- N-tiled two-pass path --------------------------------------------------
    if tile_n is None:
        cands = [t for t in range(128, N + 1, 128) if N % t == 0]
        tile_n = N
        for t in sorted(cands, reverse=True):
            if 2 * C * t * (4 + out_isz) + (2 * m_pad + 3 * C + 4) * t * 4 <= budget:
                tile_n = t
                break
    assert N % tile_n == 0, "tile_n must divide W*H"
    nt = N // tile_n

    P1 = m_pad + C
    w_kv = jnp.zeros((P1, C), jnp.float32)
    w_kv = w_kv.at[0:M].set(params["wk"])
    w_kv = w_kv.at[m_pad:m_pad + C].set(params["wv"])
    b_kv = jnp.zeros((P1, 1), jnp.float32)
    b_kv = b_kv.at[0:M, 0].set(params["bk"])
    b_kv = b_kv.at[m_pad:m_pad + C, 0].set(params["bv"])
    w_kv = w_kv.astype(jnp.bfloat16)

    w_q = jnp.zeros((m_pad, C), jnp.float32).at[0:M].set(params["wq"])
    w_q = w_q.astype(jnp.bfloat16)
    b_q = jnp.zeros((m_pad, 1), jnp.float32).at[0:M, 0].set(params["bq"])

    need1 = (2 * C * tile_n * 4 + (P1 + m_pad + C) * tile_n * 4 + C * tile_n * 2
             + 2 * (P1 * C * 2 + P1 * 4) + C * m_pad * 4 + m_pad * 4)
    vmem1 = int(min(cap - (8 << 20), need1 + (16 << 20)))

    kv, ksum = pl.pallas_call(
        functools.partial(_pam_pass1_kernel, m_pad=m_pad, m_valid=M, channels=C),
        out_shape=(jax.ShapeDtypeStruct((B, C, m_pad), jnp.float32),
                   jax.ShapeDtypeStruct((B, m_pad, 1), jnp.float32)),
        grid_spec=pltpu.PrefetchScalarGridSpec(
            num_scalar_prefetch=0,
            grid=(B, nt),
            in_specs=[
                pl.BlockSpec((1, C, tile_n), lambda b, t: (b, 0, t)),
                pl.BlockSpec((P1, C), lambda b, t: (0, 0)),
                pl.BlockSpec((P1, 1), lambda b, t: (0, 0)),
            ],
            out_specs=[pl.BlockSpec((1, C, m_pad), lambda b, t: (b, 0, 0)),
                       pl.BlockSpec((1, m_pad, 1), lambda b, t: (b, 0, 0))],
        ),
        compiler_params=pltpu.CompilerParams(
            dimension_semantics=("parallel", "arbitrary"),
            vmem_limit_bytes=vmem1),
        cost_estimate=pl.CostEstimate(
            flops=B * (2 * P1 * C * N + 2 * C * m_pad * N),
            transcendentals=B * m_pad * N,
            bytes_accessed=B * C * N * 4 + B * (C * m_pad + m_pad) * 4),
    )(x, w_kv, b_kv)

    need2 = (2 * C * tile_n * (4 + out_isz) + (2 * m_pad + 2 * C) * tile_n * 4
             + C * tile_n * 2 + C * m_pad * 4 + m_pad * 4
             + 2 * (m_pad * C * 2 + m_pad * 4))
    vmem2 = int(min(cap - (8 << 20), need2 + (16 << 20)))

    out = pl.pallas_call(
        functools.partial(_pam_pass2_kernel, m_pad=m_pad, m_valid=M, eps=eps),
        out_shape=jax.ShapeDtypeStruct((B, C, N), out_dtype),
        grid_spec=pltpu.PrefetchScalarGridSpec(
            num_scalar_prefetch=0,
            grid=(B, nt),
            in_specs=[
                pl.BlockSpec((1, C, tile_n), lambda b, t: (b, 0, t)),
                pl.BlockSpec((m_pad, C), lambda b, t: (0, 0)),
                pl.BlockSpec((m_pad, 1), lambda b, t: (0, 0)),
                pl.BlockSpec((1, C, m_pad), lambda b, t: (b, 0, 0)),
                pl.BlockSpec((1, m_pad, 1), lambda b, t: (b, 0, 0)),
                pl.BlockSpec(memory_space=pltpu.MemorySpace.SMEM),
            ],
            out_specs=pl.BlockSpec((1, C, tile_n), lambda b, t: (b, 0, t)),
        ),
        compiler_params=pltpu.CompilerParams(
            dimension_semantics=("parallel", "parallel"),
            vmem_limit_bytes=vmem2),
        cost_estimate=pl.CostEstimate(
            flops=B * (2 * m_pad * C * N + 2 * C * m_pad * N + 10 * C * N),
            transcendentals=B * (m_pad * N + N),
            bytes_accessed=B * C * N * (4 + out_isz)),
    )(x, w_q, b_q, kv, ksum, gamma)
    return out.reshape(B, C, W, H)


# ----------------------------------------------------------------------------
# Pure-JAX reference (mirrors the PyTorch forward)
# ----------------------------------------------------------------------------
def pam_module_reference(x_nchw, params, *, eps=1e-6, matmul_in_bf16=False):
    B, C, W, H = x_nchw.shape
    N = W * H
    x = x_nchw.reshape(B, C, N).astype(jnp.float32)

    def prep(a):
        if matmul_in_bf16:
            return a.astype(jnp.bfloat16).astype(jnp.float32)
        return a

    xm = prep(x)
    wq, wk, wv = prep(params["wq"]), prep(params["wk"]), prep(params["wv"])
    bq, bk, bv = params["bq"], params["bk"], params["bv"]
    gamma = params["gamma"][0]

    Q = jnp.einsum("mc,bcn->bmn", wq, xm) + bq[None, :, None]
    K = jnp.einsum("mc,bcn->bmn", wk, xm) + bk[None, :, None]
    V = jnp.einsum("oc,bcn->bon", wv, xm) + bv[None, :, None]
    Qs = jax.nn.softplus(Q)                                   # (B, M, N)
    Ks = jax.nn.softplus(K)                                   # (B, M, N)
    KV = jnp.einsum("bmn,bcn->bmc", Ks, V)                    # (B, M, C)
    denom = jnp.einsum("bmn,bm->bn", Qs, jnp.sum(Ks, axis=-1) + eps)
    weight_value = jnp.einsum("bmn,bmc->bcn", Qs, KV) / denom[:, None, :]
    return (x + gamma * weight_value).reshape(B, C, W, H)


def make_params(key, in_places, scale=8):
    """Deterministic synthetic parameters (shapes from PAM_Module.__init__)."""
    M = in_places // scale
    k1, k2, k3, k4, k5, k6 = jax.random.split(key, 6)
    return {
        "wq": jax.random.normal(k1, (M, in_places), jnp.float32) * 0.1,
        "bq": jax.random.normal(k2, (M,), jnp.float32) * 0.1,
        "wk": jax.random.normal(k3, (M, in_places), jnp.float32) * 0.1,
        "bk": jax.random.normal(k4, (M,), jnp.float32) * 0.1,
        "wv": jax.random.normal(k5, (in_places, in_places), jnp.float32) * 0.1,
        "bv": jax.random.normal(k6, (in_places,), jnp.float32) * 0.1,
        # PyTorch init is gamma = 0 (output would equal x); use a nonzero value
        # so the attention path is actually exercised.
        "gamma": jnp.array([0.5], jnp.float32),
    }


if __name__ == "__main__":
    B, C, Wd, Ht = 2, 32, 16, 16   # in_places=32, scale=8 -> M=4, N=256
    key = jax.random.PRNGKey(0)
    kx, kp, kx2 = jax.random.split(key, 3)
    x = jax.random.normal(kx, (B, C, Wd, Ht), jnp.float32)
    params = make_params(kp, C, scale=8)

    ref_f32 = pam_module_reference(x, params)
    ref_mixed = pam_module_reference(x, params, matmul_in_bf16=True)

    # 1) Fast path: monolithic (C, N) blocks, one grid step per batch here.
    out = jax.block_until_ready(pam_module_pallas(x, params))
    np.testing.assert_allclose(np.asarray(out), np.asarray(ref_mixed),
                               rtol=2e-3, atol=2e-3)
    np.testing.assert_allclose(np.asarray(out), np.asarray(ref_f32),
                               rtol=2e-2, atol=2e-2)

    # 2) N-tiled two-pass path (the big-feature-map / v7x route), forced at small
    #    shapes so it is exercised and checked too.
    out_t = jax.block_until_ready(
        pam_module_pallas(x, params, force_tiled=True, tile_n=128))
    np.testing.assert_allclose(np.asarray(out_t), np.asarray(ref_mixed),
                               rtol=2e-3, atol=2e-3)

    # 3) Bt > 1 batching path (B=8 -> Bt=2, 4 grid steps).
    xb = jax.random.normal(kx2, (8, C, Wd, Ht), jnp.float32)
    out_b = jax.block_until_ready(pam_module_pallas(xb, params))
    ref_b = pam_module_reference(xb, params, matmul_in_bf16=True)
    np.testing.assert_allclose(np.asarray(out_b), np.asarray(ref_b),
                               rtol=2e-3, atol=2e-3)

    print("KERNEL_OK")
</pallas_src>

<mosaic_0001>
module attributes {stable_mosaic.version = 11 : i64} {
  func.func @_pam_fused_kernel(%arg0: i32, %arg1: memref<1x32x256xf32, #tpu.memory_space<vmem>>, %arg2: memref<48x32xbf16, #tpu.memory_space<vmem>>, %arg3: memref<48x1xf32, #tpu.memory_space<vmem>>, %arg4: memref<1xf32, #tpu.memory_space<smem>>, %arg5: memref<1x32x256xf32, #tpu.memory_space<vmem>>) attributes {dimension_semantics = [#tpu.dimension_semantics<parallel>], iteration_bounds = array<i64: 2>, scalar_prefetch = 0 : i64, scratch_operands = 0 : i64, tpu.core_type = #tpu.core_type<tc>, window_params = [{transform_indices = @transform_0, window_bounds = array<i64: 1, 32, 256>}, {pipeline_mode = #tpu.pipeline_mode<synchronous>, transform_indices = @transform_1, window_bounds = array<i64: 48, 32>}, {pipeline_mode = #tpu.pipeline_mode<synchronous>, transform_indices = @transform_2, window_bounds = array<i64: 48, 1>}, {transform_indices = @transform_3, window_bounds = array<i64: 1>}, {transform_indices = @transform_4, window_bounds = array<i64: 1, 32, 256>}]} {
    %c0 = arith.constant 0 : index
    %0 = memref.load %arg4[%c0] : memref<1xf32, #tpu.memory_space<smem>>
    %1 = tpu.iota {dimensions = array<i32: 0>} : vector<8x1xi32>
    %c4_i32 = arith.constant 4 : i32
    %2 = vector.broadcast %c4_i32 : i32 to vector<8x1xi32>
    %3 = arith.cmpi slt, %1, %2 : vector<8x1xi32>
    %c0_0 = arith.constant 0 : index
    %c0_1 = arith.constant 0 : index
    %c0_2 = arith.constant 0 : index
    %4 = vector.load %arg1[%c0_0, %c0_1, %c0_2] : memref<1x32x256xf32, #tpu.memory_space<vmem>>, vector<1x32x256xf32>
    %5 = vector.shape_cast %4 : vector<1x32x256xf32> to vector<32x256xf32>
    %6 = arith.truncf %5 : vector<32x256xf32> to vector<32x256xbf16>
    %c0_3 = arith.constant 0 : index
    %c0_4 = arith.constant 0 : index
    %7 = vector.load %arg2[%c0_3, %c0_4] : memref<48x32xbf16, #tpu.memory_space<vmem>>, vector<48x32xbf16>
    %cst = arith.constant dense<0.000000e+00> : vector<48x256xf32>
    %8 = tpu.matmul %7, %6, %cst {dimension_numbers = #tpu.dot_dimension_numbers<[1], [0], [0], [1], [0, 0, 1, 1], [], []>} : vector<48x32xbf16>, vector<32x256xbf16>, vector<48x256xf32> -> vector<48x256xf32>
    %c0_5 = arith.constant 0 : index
    %c0_6 = arith.constant 0 : index
    %9 = vector.load %arg3[%c0_5, %c0_6] : memref<48x1xf32, #tpu.memory_space<vmem>>, vector<48x1xf32>
    %10 = vector.broadcast %9 : vector<48x1xf32> to vector<48x256xf32>
    %11 = arith.addf %8, %10 : vector<48x256xf32>
    %12 = vector.extract_strided_slice %11 {offsets = [0, 0], sizes = [8, 256], strides = [1, 1]} : vector<48x256xf32> to vector<8x256xf32>
    %cst_7 = arith.constant 0.000000e+00 : f32
    %13 = vector.broadcast %cst_7 : f32 to vector<8x256xf32>
    %14 = arith.maximumf %12, %13 : vector<8x256xf32>
    %15 = vector.broadcast %cst_7 : f32 to vector<8x256xf32>
    %16 = arith.subf %12, %15 : vector<8x256xf32>
    %17 = arith.cmpf one, %16, %16 : vector<8x256xf32>
    %18 = vector.broadcast %cst_7 : f32 to vector<8x256xf32>
    %19 = arith.addf %12, %18 : vector<8x256xf32>
    %20 = math.absf %16 : vector<8x256xf32>
    %cst_8 = arith.constant 0.000000e+00 : f32
    %21 = vector.broadcast %cst_8 : f32 to vector<8x256xf32>
    %22 = arith.subf %21, %20 : vector<8x256xf32>
    %23 = math.exp %22 : vector<8x256xf32>
    %24 = math.log1p %23 : vector<8x256xf32>
    %25 = arith.addf %14, %24 : vector<8x256xf32>
    %26 = arith.select %17, %19, %25 : vector<8x256xi1>, vector<8x256xf32>
    %cst_9 = arith.constant 0.000000e+00 : f32
    %27 = vector.shape_cast %3 : vector<8x1xi1> to vector<8x1xi1>
    %28 = vector.broadcast %27 : vector<8x1xi1> to vector<8x256xi1>
    %29 = vector.broadcast %cst_9 : f32 to vector<8x256xf32>
    %30 = arith.select %28, %26, %29 : vector<8x256xi1>, vector<8x256xf32>
    %31 = vector.extract_strided_slice %11 {offsets = [8, 0], sizes = [8, 256], strides = [1, 1]} : vector<48x256xf32> to vector<8x256xf32>
    %cst_10 = arith.constant 0.000000e+00 : f32
    %32 = vector.broadcast %cst_10 : f32 to vector<8x256xf32>
    %33 = arith.maximumf %31, %32 : vector<8x256xf32>
    %34 = vector.broadcast %cst_10 : f32 to vector<8x256xf32>
    %35 = arith.subf %31, %34 : vector<8x256xf32>
    %36 = arith.cmpf one, %35, %35 : vector<8x256xf32>
    %37 = vector.broadcast %cst_10 : f32 to vector<8x256xf32>
    %38 = arith.addf %31, %37 : vector<8x256xf32>
    %39 = math.absf %35 : vector<8x256xf32>
    %cst_11 = arith.constant 0.000000e+00 : f32
    %40 = vector.broadcast %cst_11 : f32 to vector<8x256xf32>
    %41 = arith.subf %40, %39 : vector<8x256xf32>
    %42 = math.exp %41 : vector<8x256xf32>
    %43 = math.log1p %42 : vector<8x256xf32>
    %44 = arith.addf %33, %43 : vector<8x256xf32>
    %45 = arith.select %36, %38, %44 : vector<8x256xi1>, vector<8x256xf32>
    %cst_12 = arith.constant 0.000000e+00 : f32
    %46 = vector.shape_cast %3 : vector<8x1xi1> to vector<8x1xi1>
    %47 = vector.broadcast %46 : vector<8x1xi1> to vector<8x256xi1>
    %48 = vector.broadcast %cst_12 : f32 to vector<8x256xf32>
    %49 = arith.select %47, %45, %48 : vector<8x256xi1>, vector<8x256xf32>
    %50 = vector.extract_strided_slice %11 {offsets = [16, 0], sizes = [32, 256], strides = [1, 1]} : vector<48x256xf32> to vector<32x256xf32>
    %cst_13 = arith.constant dense<0.000000e+00> : vector<32x8xf32>
    %51 = tpu.matmul %50, %49, %cst_13 {dimension_numbers = #tpu.dot_dimension_numbers<[1], [1], [0], [0], [0, 0, 1, 0], [], []>} : vector<32x256xf32>, vector<8x256xf32>, vector<32x8xf32> -> vector<32x8xf32>
    %cst_14 = arith.constant dense<0.000000e+00> : vector<8xf32>
    %52 = vector.multi_reduction <add>, %49, %cst_14 [1] : vector<8x256xf32> to vector<8xf32>
    %53 = vector.shape_cast %52 : vector<8xf32> to vector<8x1xf32>
    %cst_15 = arith.constant 9.99999997E-7 : f32
    %54 = vector.broadcast %cst_15 : f32 to vector<8x1xf32>
    %55 = arith.addf %53, %54 : vector<8x1xf32>
    %56 = vector.broadcast %55 : vector<8x1xf32> to vector<8x256xf32>
    %57 = arith.mulf %30, %56 : vector<8x256xf32>
    %cst_16 = arith.constant dense<0.000000e+00> : vector<256xf32>
    %58 = vector.multi_reduction <add>, %57, %cst_16 [0] : vector<8x256xf32> to vector<256xf32>
    %59 = vector.shape_cast %58 : vector<256xf32> to vector<1x256xf32>
    %60 = tpu.reciprocal %59 {approx = true} : vector<1x256xf32> -> vector<1x256xf32>
    %61 = arith.mulf %59, %60 : vector<1x256xf32>
    %cst_17 = arith.constant 2.000000e+00 : f32
    %62 = vector.broadcast %cst_17 : f32 to vector<1x256xf32>
    %63 = arith.subf %62, %61 : vector<1x256xf32>
    %64 = arith.mulf %60, %63 : vector<1x256xf32>
    %cst_18 = arith.constant dense<0.000000e+00> : vector<32x256xf32>
    %65 = tpu.matmul %51, %30, %cst_18 {dimension_numbers = #tpu.dot_dimension_numbers<[1], [0], [0], [1], [0, 0, 1, 1], [], []>} : vector<32x8xf32>, vector<8x256xf32>, vector<32x256xf32> -> vector<32x256xf32>
    %66 = vector.broadcast %64 : vector<1x256xf32> to vector<32x256xf32>
    %67 = arith.mulf %65, %66 : vector<32x256xf32>
    %68 = vector.broadcast %0 : f32 to vector<32x256xf32>
    %69 = arith.mulf %68, %67 : vector<32x256xf32>
    %70 = arith.addf %5, %69 : vector<32x256xf32>
    %c0_19 = arith.constant 0 : index
    %c0_20 = arith.constant 0 : index
    %c0_21 = arith.constant 0 : index
    %71 = vector.load %arg5[%c0_19, %c0_20, %c0_21] : memref<1x32x256xf32, #tpu.memory_space<vmem>>, vector<1x32x256xf32>
    %72 = vector.shape_cast %71 : vector<1x32x256xf32> to vector<32x256xf32>
    %73 = vector.shape_cast %70 : vector<32x256xf32> to vector<1x32x256xf32>
    tpu.vector_store %arg5[%c0_19, %c0_20, %c0_21], %73 {strides = array<i32>} : memref<1x32x256xf32, #tpu.memory_space<vmem>>, vector<1x32x256xf32>,
    return
  }
  func.func @transform_0(%arg0: i32) -> (i32, i32, i32) {
    %c0_i32 = arith.constant 0 : i32
    %c0_i32_0 = arith.constant 0 : i32
    %c0_i32_1 = arith.constant 0 : i32
    return %arg0, %c0_i32, %c0_i32_0 : i32, i32, i32
  }
  func.func @transform_1(%arg0: i32) -> (i32, i32) {
    %c0_i32 = arith.constant 0 : i32
    %c0_i32_0 = arith.constant 0 : i32
    %c0_i32_1 = arith.constant 0 : i32
    return %c0_i32, %c0_i32_0 : i32, i32
  }
  func.func @transform_2(%arg0: i32) -> (i32, i32) {
    %c0_i32 = arith.constant 0 : i32
    %c0_i32_0 = arith.constant 0 : i32
    %c0_i32_1 = arith.constant 0 : i32
    return %c0_i32, %c0_i32_0 : i32, i32
  }
  func.func @transform_3(%arg0: i32) -> i32 {
    %c0_i32 = arith.constant 0 : i32
    %c0_i32_0 = arith.constant 0 : i32
    return %c0_i32 : i32
  }
  func.func @transform_4(%arg0: i32) -> (i32, i32, i32) {
    %c0_i32 = arith.constant 0 : i32
    %c0_i32_0 = arith.constant 0 : i32
    %c0_i32_1 = arith.constant 0 : i32
    return %arg0, %c0_i32, %c0_i32_0 : i32, i32, i32
  }
}

</mosaic_0001>

<llo_original>
// kernel: tpu_custom_call.1
$region0: #{tpu_custom_call.1}
  #allocation0 [shape = 'u32[]', space=smem, size = 0x4, offset = 0x4, fixed_abs, tag = 'smem constant byte address 0x4 - core index']
  #allocation1 [shape = 'u32[144,128]{1,0:T(1,128)}', space=vmem, size = 0x12000, scoped, tag = 'internal scratch']
  #allocation2 [shape = 'f32[1]{0:T(128)S(6)}', space=smem, size = 0x200, scoped, tag = 'scoped memory for tpu_custom_call.1']
  %s0 = inlined_call_operand.hbm [shape: f32[2,32,256], index: 0, kind: input, shape index: {}]
  %s1 = inlined_call_operand.vmem [shape: bf16[48,32], index: 1, kind: input, shape index: {}]
  %s2 = inlined_call_operand.vmem [shape: f32[48,1], index: 2, kind: input, shape index: {}]
  %s3 = inlined_call_operand.<no memory space> [shape: f32[1], index: 3, kind: input, shape index: {}]
  %s4 = inlined_call_operand.hbm [shape: f32[2,32,256], index: 4, kind: output, shape index: {}]
  %s5 = sld [smem:[#allocation0]]
  $region53: #{tpu_custom_call.1} parent=0
    _
  %s7 = ssub.s32 1, %s5
  %s8 = scalar_select 0, %s7, %s5
  %9 = sst [smem:[#allocation2]] %s3
  $region1: #{tpu_custom_call.1} parent=0
    #allocation3 [shape = 'u8[65536]{0}', space=vmem, size = 0x10000, scoped, tag = 'input window, operand 0']
    #allocation4 [shape = 's32[2]{0}', space=sflag, size = 0x8, scoped, tag = 'scoped memory for tpu_custom_call.1']
    #allocation5 [shape = 's32[2]{0}', space=sflag, size = 0x8, scoped, tag = 'scoped memory for tpu_custom_call.1']
    #allocation6 [shape = 'u8[65536]{0}', space=vmem, size = 0x10000, scoped, tag = 'output window, operand 0']
    %10 = vsyncpa [#allocation4], 0
    %s11 = scalar_lea.sflag [#allocation4], 1
    %12 = vsyncpa %s11, 0
    %13 = vsyncpa [#allocation5], 0
    %s14 = scalar_lea.sflag [#allocation5], 1
    %15 = vsyncpa %s14, 0
    loop: start=0, step=1, limit=4
    $region2: #{tpu_custom_call.1} parent=1 // loop_pre_header
      _
    $region3: #{tpu_custom_call.1} parent=1 // loop_header
      %s17 = sphi 0, %s21
      %p18 = scmp.ge.s32.totalorder %s17, 4
      %s27 = sphi 0, %s29
      %s30 = sphi 0, %s27
      %s31 = sphi 0, %s30
      %s47 = sphi 0, %s31
      %s51 = sphi 0, %s51
      %s53 = sphi 0, %s51
      %s54 = sphi 0, %s53
      %s68 = sphi 0, %s54
      %s72 = sphi 0, %s72
      %s74 = sphi 0, %s72
      %s75 = sphi 0, %s74
      %s89 = sphi 0, %s75
      %s93 = sphi 0, %s93
      %s95 = sphi 0, %s93
      %s96 = sphi 0, %s95
      %s110 = sphi 0, %s96
      %s116 = sphi 0, %s118
      %s119 = sphi 0, %s116
      %s120 = sphi 0, %s119
      %s136 = sphi 0, %s120
    $region4: #{tpu_custom_call.1} parent=1 // loop_header_branch
      %20 = sbr.rel (%p18) target = $region8
    $region5: #{tpu_custom_call.1} parent=1 // loop_body
      %s22 = ssub.s32 %s17, 1
      %s23 = ssub.s32 %s17, 2
      %s24 = sadd.s32 %s17, 1
      %s25 = ssub.s32 %s17, %s24
      %p26 = scmp.eq.s32.totalorder %s25, 0
      %s28 = sadd.s32 %s27, 1
      %s29 = scalar_select %p26, %s27, %s28
      %p32 = pneg %p26
      %p33 = scmp.eq.s32.totalorder %s17, 1
      %p34 = por %p32, %p33
      %p35 = scmp.ne.s32.totalorder %s27, %s30
      %p36 = scmp.eq.s32.totalorder %s17, 0
      %p37 = por %p35, %p36
      %p38 = scmp.ne.s32.totalorder %s27, %s30
      %p39 = scmp.eq.s32.totalorder %s22, 1
      %p40 = por %p38, %p39
      %p41 = scmp.ne.s32.totalorder %s30, %s31
      %p42 = scmp.eq.s32.totalorder %s22, 0
      %p43 = por %p41, %p42
      %p44 = scmp.ne.s32.totalorder %s30, %s31
      %p45 = scmp.eq.s32.totalorder %s23, 1
      %p46 = por %p44, %p45
      %p48 = scmp.ne.s32.totalorder %s31, %s47
      %p49 = scmp.eq.s32.totalorder %s23, 0
      %p50 = por %p48, %p49
      %s52 = sadd.s32 %s51, 1
      %p55 = scmp.eq.s32.totalorder %s17, 1
      %p56 = scmp.ne.s32.totalorder %s51, %s53
      %p57 = scmp.eq.s32.totalorder %s17, 0
      %p58 = por %p56, %p57
      %p59 = scmp.ne.s32.totalorder %s51, %s53
      %p60 = scmp.eq.s32.totalorder %s22, 1
      %p61 = por %p59, %p60
      %p62 = scmp.ne.s32.totalorder %s53, %s54
      %p63 = scmp.eq.s32.totalorder %s22, 0
      %p64 = por %p62, %p63
      %p65 = scmp.ne.s32.totalorder %s53, %s54
      %p66 = scmp.eq.s32.totalorder %s23, 1
      %p67 = por %p65, %p66
      %p69 = scmp.ne.s32.totalorder %s54, %s68
      %p70 = scmp.eq.s32.totalorder %s23, 0
      %p71 = por %p69, %p70
      %s73 = sadd.s32 %s72, 1
      %p76 = scmp.eq.s32.totalorder %s17, 1
      %p77 = scmp.ne.s32.totalorder %s72, %s74
      %p78 = scmp.eq.s32.totalorder %s17, 0
      %p79 = por %p77, %p78
      %p80 = scmp.ne.s32.totalorder %s72, %s74
      %p81 = scmp.eq.s32.totalorder %s22, 1
      %p82 = por %p80, %p81
      %p83 = scmp.ne.s32.totalorder %s74, %s75
      %p84 = scmp.eq.s32.totalorder %s22, 0
      %p85 = por %p83, %p84
      %p86 = scmp.ne.s32.totalorder %s74, %s75
      %p87 = scmp.eq.s32.totalorder %s23, 1
      %p88 = por %p86, %p87
      %p90 = scmp.ne.s32.totalorder %s75, %s89
      %p91 = scmp.eq.s32.totalorder %s23, 0
      %p92 = por %p90, %p91
      %s94 = sadd.s32 %s93, 1
      %p97 = scmp.eq.s32.totalorder %s17, 1
      %p98 = scmp.ne.s32.totalorder %s93, %s95
      %p99 = scmp.eq.s32.totalorder %s17, 0
      %p100 = por %p98, %p99
      %p101 = scmp.ne.s32.totalorder %s93, %s95
      %p102 = scmp.eq.s32.totalorder %s22, 1
      %p103 = por %p101, %p102
      %p104 = scmp.ne.s32.totalorder %s95, %s96
      %p105 = scmp.eq.s32.totalorder %s22, 0
      %p106 = por %p104, %p105
      %p107 = scmp.ne.s32.totalorder %s95, %s96
      %p108 = scmp.eq.s32.totalorder %s23, 1
      %p109 = por %p107, %p108
      %p111 = scmp.ne.s32.totalorder %s96, %s110
      %p112 = scmp.eq.s32.totalorder %s23, 0
      %p113 = por %p111, %p112
      %s114 = ssub.s32 %s17, %s24
      %p115 = scmp.eq.s32.totalorder %s114, 0
      %s117 = sadd.s32 %s116, 1
      %s118 = scalar_select %p115, %s116, %s117
      %p121 = pneg %p115
      %p122 = scmp.eq.s32.totalorder %s17, 1
      %p123 = por %p121, %p122
      %p124 = scmp.ne.s32.totalorder %s116, %s119
      %p125 = scmp.eq.s32.totalorder %s17, 0
      %p126 = por %p124, %p125
      %p127 = scmp.ne.s32.totalorder %s116, %s119
      %p128 = scmp.eq.s32.totalorder %s22, 1
      %p129 = por %p127, %p128
      %p130 = scmp.ne.s32.totalorder %s119, %s120
      %p131 = scmp.eq.s32.totalorder %s22, 0
      %p132 = por %p130, %p131
      %p133 = scmp.ne.s32.totalorder %s119, %s120
      %p134 = scmp.eq.s32.totalorder %s23, 1
      %p135 = por %p133, %p134
      %p137 = scmp.ne.s32.totalorder %s120, %s136
      %p138 = scmp.eq.s32.totalorder %s23, 0
      %p139 = por %p137, %p138
      %p140 = scmp.le.s32.totalorder 1, %s17
      %p141 = scmp.lt.s32.totalorder %s17, 3
      %p142 = pnand %p140, %p141
      %p143 = pneg %p142
      // Predicated region
      $region9: #{tpu_custom_call.1} parent=5 // pred_check
        _
      $region10: #{tpu_custom_call.1} parent=5 // pred_check_branch
        %145 = sbr.rel (%p142) target = $region12
      $region11: #{tpu_custom_call.1} parent=5 // pred_region
        %s146 = ssub.s32 %s17, 1
        // Predicated region
        $region13: #{tpu_custom_call.1} parent=11 // pred_check
          %p147 = pneg %p64
        $region14: #{tpu_custom_call.1} parent=11 // pred_check_branch
          %149 = sbr.rel (%p147) target = $region16
        $region15: #{tpu_custom_call.1} parent=11 // pred_region
          _
        $region16: #{tpu_custom_call.1} parent=11 // pred_fallthru
          _
        // Predicated region
        $region17: #{tpu_custom_call.1} parent=11 // pred_check
          %p150 = pneg %p85
        $region18: #{tpu_custom_call.1} parent=11 // pred_check_branch
          %152 = sbr.rel (%p150) target = $region20
        $region19: #{tpu_custom_call.1} parent=11 // pred_region
          _
        $region20: #{tpu_custom_call.1} parent=11 // pred_fallthru
          _
        // Predicated region
        $region21: #{tpu_custom_call.1} parent=11 // pred_check
          %p153 = pneg %p106
        $region22: #{tpu_custom_call.1} parent=11 // pred_check_branch
          %155 = sbr.rel (%p153) target = $region24
        $region23: #{tpu_custom_call.1} parent=11 // pred_region
          _
        $region24: #{tpu_custom_call.1} parent=11 // pred_fallthru
          _
      $region12: #{tpu_custom_call.1} parent=5 // pred_fallthru
        _
      %p156 = scmp.lt.s32.totalorder %s17, 2
      // Predicated region
      $region25: #{tpu_custom_call.1} parent=5 // pred_check
        %p157 = pneg %p156
      $region26: #{tpu_custom_call.1} parent=5 // pred_check_branch
        %159 = sbr.rel (%p157) target = $region28
      $region27: #{tpu_custom_call.1} parent=5 // pred_region
        // Predicated region
        $region29: #{tpu_custom_call.1} parent=27 // pred_check
          %p160 = pneg %p37
        $region30: #{tpu_custom_call.1} parent=27 // pred_check_branch
          %162 = sbr.rel (%p160) target = $region32
        $region31: #{tpu_custom_call.1} parent=27 // pred_region
          %s163 = sand.u32 %s27, 1
          %s164 = scalar_lea.sflag [#allocation4], %s163
          %s165 = sand.u32 %s27, 1
          %s166 = smul.addr %s165, 64
          %s167 = scalar_lea.vmem [#allocation3], %s166
          %s169 = ssub.s32 1024, 1024
          %170 = vsyncadd %s164, %s169
          %s171 = smul.addr %s17, 8
          %s172 = smul.addr %s171, 128
          %s173 = scalar_lea.hbm %s0, %s172
          %s174 = sshll.u32 %s167, 4
          %s175 = int_to_ptr.vmem [resolvable:$true] %s174
          %180 = dma.hbm_to_vmem [thread:$0]  %s173, 1024, %s175, %s164, 256, 256, 16
        $region32: #{tpu_custom_call.1} parent=27 // pred_fallthru
          _
      $region28: #{tpu_custom_call.1} parent=5 // pred_fallthru
        _
      %p181 = scmp.le.s32.totalorder 1, %s17
      %p182 = scmp.lt.s32.totalorder %s17, 3
      %p183 = pnand %p181, %p182
      %p184 = pneg %p183
      // Predicated region
      $region33: #{tpu_custom_call.1} parent=5 // pred_check
        _
      $region34: #{tpu_custom_call.1} parent=5 // pred_check_branch
        %186 = sbr.rel (%p183) target = $region36
      $region35: #{tpu_custom_call.1} parent=5 // pred_region
        %s187 = ssub.s32 %s17, 1
        %s188 = sand.u32 %s30, 1
        %s189 = scalar_lea.sflag [#allocation4], %s188
        %s190 = sand.u32 %s30, 1
        %s191 = smul.addr %s190, 64
        %s192 = scalar_lea.vmem [#allocation3], %s191
        // Predicated region
        $region37: #{tpu_custom_call.1} parent=35 // pred_check
          %p193 = pneg %p43
        $region38: #{tpu_custom_call.1} parent=35 // pred_check_branch
          %195 = sbr.rel (%p193) target = $region40
        $region39: #{tpu_custom_call.1} parent=35 // pred_region
          %196 = dma.done %s189, 1024
        $region40: #{tpu_custom_call.1} parent=35 // pred_fallthru
          _
        %s197 = sand.u32 %s30, 1
        %s198 = scalar_lea.sflag [#allocation4], %s197
        %s199 = sand.u32 %s30, 1
        %s200 = smul.addr %s199, 64
        %s201 = scalar_lea.vmem [#allocation3], %s200
        %p202 = pneg %p43
        %p203 = pneg %p40
        %p204 = pneg %p64
        %p205 = pneg %p61
        %p206 = pneg %p85
        %p207 = pneg %p82
        %p208 = pneg %p106
        %p209 = pneg %p103
        %p210 = pneg %p132
        %p211 = pneg %p129
        %s212 = sand.u32 %s119, 1
        %s213 = scalar_lea.sflag [#allocation5], %s212
        %s214 = sand.u32 %s119, 1
        %s215 = smul.addr %s214, 64
        %s216 = scalar_lea.vmem [#allocation6], %s215
        %s218 = sld [smem:[#allocation2]]
        %v219 = vlaneseq
        %v220 = vshrl.u32 %v219, 7
        %vm221 = vcmp.lt.s32.totalorder %v220, 4
        %v222 = vld [vmem:[%s192] sm:$0xff]
        %v223 = vld [vmem:[%s192 + $0x8] sm:$0xff]
        %v224 = vld [vmem:[%s192 + $0x10] sm:$0xff]
        %v225 = vld [vmem:[%s192 + $0x18] sm:$0xff]
        %v226 = vld [vmem:[%s192 + $0x20] sm:$0xff]
        %v227 = vld [vmem:[%s192 + $0x28] sm:$0xff]
        %v228 = vld [vmem:[%s192 + $0x30] sm:$0xff]
        %v229 = vld [vmem:[%s192 + $0x38] sm:$0xff]
        %v230 = vpack.c.bf16 %v224, %v222
        %v231 = vpack.c.bf16 %v225, %v223
        %v232 = vpack.c.bf16 %v228, %v226
        %v233 = vpack.c.bf16 %v229, %v227
        %v234 = vld [vmem:[%s1] sm:$0xf]
        %v235 = vld [vmem:[%s1 + $0x4] sm:$0xf]
        %v236 = vld [vmem:[%s1 + $0x8] sm:$0xf]
        %v237 = vld [vmem:[%s1 + $0xc] sm:$0xf]
        %v238 = vld [vmem:[%s1 + $0x10] sm:$0xf]
        %v239 = vld [vmem:[%s1 + $0x14] sm:$0xf]
        %v240 = vld [vmem:[%s2] sm:$0xff]
        %v241 = vld [vmem:[%s2 + $0x8] sm:$0xff]
        %v242 = vld [vmem:[%s2 + $0x10] sm:$0xff]
        %v243 = vld [vmem:[%s2 + $0x18] sm:$0xff]
        %v244 = vld [vmem:[%s2 + $0x20] sm:$0xff]
        %v245 = vld [vmem:[%s2 + $0x28] sm:$0xff]
        %247 = vset.pattern.permute.xlu0 0
        %248 = vperm.xlu0 %247, %v240
        %v249 = vpop.permute.xlu0 %248
        %252 = vset.pattern.permute.xlu0 0
        %253 = vperm.xlu0 %252, %v241
        %v254 = vpop.permute.xlu0 %253
        %257 = vset.pattern.permute.xlu0 0
        %258 = vperm.xlu0 %257, %v242
        %v259 = vpop.permute.xlu0 %258
        %262 = vset.pattern.permute.xlu0 0
        %263 = vperm.xlu0 %262, %v243
        %v264 = vpop.permute.xlu0 %263
        %267 = vset.pattern.permute.xlu0 0
        %268 = vperm.xlu0 %267, %v244
        %v269 = vpop.permute.xlu0 %268
        %272 = vset.pattern.permute.xlu0 0
        %273 = vperm.xlu0 %272, %v245
        %v274 = vpop.permute.xlu0 %273
        %v282 = vunpack.c.l.b16 %v234
        %v283 = vunpack.c.l.b16 %v235
        %v284 = vunpack.c.l.b16 %v236
        %v285 = vunpack.c.l.b16 %v237
        %v286 = vunpack.c.l.b16 %v238
        %v287 = vunpack.c.l.b16 %v239
        %v288 = vpack.c.b16 %v283, %v282
        %v289 = vpack.c.b16 %v285, %v284
        %v290 = vpack.c.b16 %v287, %v286
        %vm291 = vcmask 261120
        %v293 = vsel %vm291, %v288, 0
        %v296 = vsel %vm291, %v289, 0
        %v299 = vsel %vm291, %v290, 0
        %301 = vmatprep.subr.bf16.mxu0 %v231
        %302 = vmatpush1.bf16.msra.mxu0 %v230
        %303 = vmatprep.subr.bf16.mxu0 %v233
        %304 = vmatpush1.bf16.msra.mxu0 %v232
        %305 = vmatprep.subr.bf16.mxu0 0
        %306 = vmatpush1.bf16.msra.mxu0 0
        %307 = vmatprep.subr.bf16.mxu0 0
        %308 = vmatpush1.bf16.msra.mxu0 0
        %309 = vmatprep.subr.bf16.mxu0 0
        %310 = vmatpush1.bf16.msra.mxu0 0
        %311 = vmatprep.subr.bf16.mxu0 0
        %312 = vmatpush1.bf16.msra.mxu0 0
        %313 = vmatprep.subr.bf16.mxu0 0
        %314 = vmatpush1.bf16.msra.mxu0 0
        %315 = vmatprep.subr.bf16.mxu0 0
        %316 = vmatpush1.bf16.msra.mxu0 0
        %317 = vmatprep.subr.bf16.mxu0 0
        %318 = vmatpush1.bf16.msra.mxu0 0
        %319 = vmatprep.subr.bf16.mxu0 0
        %320 = vmatpush1.bf16.msra.mxu0 0
        %321 = vmatprep.subr.bf16.mxu0 0
        %322 = vmatpush1.bf16.msra.mxu0 0
        %323 = vmatprep.subr.bf16.mxu0 0
        %324 = vmatpush1.bf16.msra.mxu0 0
        %325 = vmatprep.subr.bf16.mxu0 0
        %326 = vmatpush1.bf16.msra.mxu0 0
        %327 = vmatprep.subr.bf16.mxu0 0
        %328 = vmatpush1.bf16.msra.mxu0 0
        %329 = vmatprep.subr.bf16.mxu0 0
        %330 = vmatpush1.bf16.msra.mxu0 0
        %331 = vmatprep.subr.bf16.mxu0 0
        %332 = vmatpush1.bf16.msra.mxu0 0
        %333 = vmatprep.mubr.bf16.mxu0 0
        %334 = vmatmul.mubr.bf16.gmra.mrb[0].mxu0 %v293
        %v335 = vpop.f32.mrb[0].mxu0
        %v336 = vadd.f32 %v249, %v335
        %v337 = vpop.f32.mrb[0].mxu0
        %v338 = vadd.f32 %v249, %v337
        %v339 = vpop.f32.mrb[0].mxu0
        %v340 = vadd.f32 %v254, %v339
        %v341 = vpop.f32.mrb[0].mxu0
        %v342 = vadd.f32 %v254, %v341
        %343 = vmatprep.mubr.bf16.mxu0 0
        %344 = vmatmul.mubr.bf16.gmra.mrb[0].mxu0 %v296
        %v345 = vpop.f32.mrb[0].mxu0
        %v346 = vadd.f32 %v259, %v345
        %v347 = vpop.f32.mrb[0].mxu0
        %v348 = vadd.f32 %v259, %v347
        %v349 = vpop.f32.mrb[0].mxu0
        %v350 = vadd.f32 %v264, %v349
        %v351 = vpop.f32.mrb[0].mxu0
        %v352 = vadd.f32 %v264, %v351
        %353 = vmatprep.mubr.bf16.mxu0 0
        %354 = vmatmul.mubr.bf16.gmra.mrb[0].mxu0 %v299
        %v355 = vpop.f32.mrb[0].mxu0
        %v356 = vadd.f32 %v269, %v355
        %v357 = vpop.f32.mrb[0].mxu0
        %v358 = vadd.f32 %v269, %v357
        %v359 = vpop.f32.mrb[0].mxu0
        %v360 = vadd.f32 %v274, %v359
        %v361 = vpop.f32.mrb[0].mxu0
        %v362 = vadd.f32 %v274, %v361
        %363 = vdwg.mxu0
        %v364 = vmax.f32 %v336, 0.0
        %v365 = vmax.f32 %v338, 0.0
        %vm366 = vcmp.ne.f32.partialorder %v336, %v336
        %vm367 = vcmp.ne.f32.partialorder %v338, %v338
        %v368 = vadd.f32 %v336, 0.0
        %v369 = vadd.f32 %v338, 0.0
        %v370 = vand.u32 2147483647, %v336
        %v371 = vand.u32 2147483647, %v338
        %v372 = vsub.f32 0.0, %v370
        %v373 = vsub.f32 0.0, %v371
        %v374 = vmul.f32 %v372, 1.442695
        %v375 = vpow.pop %v374
        %v376 = vmul.f32 %v373, 1.442695
        %v377 = vpow.pop %v376
        %v378 = vadd.f32 %v375, 1.0
        %v379 = vlog2.pop %v378
        %v380 = vmul.f32 %v379, 0.6931472
        %v381 = vmul.f32 -0.5, %v375
        %v382 = vadd.f32 %v381, 1.0
        %v383 = vmul.f32 %v382, %v375
        %v384 = vand.u32 2147483647, %v375
        %vm385 = vcmp.lt.f32.partialorder %v384, 0.0004427343
        %v386 = vsel %vm385, %v383, %v380
        %v387 = vadd.f32 %v377, 1.0
        %v388 = vlog2.pop %v387
        %v389 = vmul.f32 %v388, 0.6931472
        %v390 = vmul.f32 -0.5, %v377
        %v391 = vadd.f32 %v390, 1.0
        %v392 = vmul.f32 %v391, %v377
        %v393 = vand.u32 2147483647, %v377
        %vm394 = vcmp.lt.f32.partialorder %v393, 0.0004427343
        %v395 = vsel %vm394, %v392, %v389
        %v396 = vadd.f32 %v364, %v386
        %v397 = vadd.f32 %v365, %v395
        %v398 = vsel %vm366, %v368, %v396
        %v399 = vsel %vm367, %v369, %v397
        %v400 = vsel %vm221, 1, 0
        %vm401 = vcmp.eq.s32.totalorder %v400, 1
        %v402 = vsel %vm401, %v398, 0.0
        %v403 = vsel %vm401, %v399, 0.0
        %v404 = vmax.f32 %v340, 0.0
        %v405 = vmax.f32 %v342, 0.0
        %vm406 = vcmp.ne.f32.partialorder %v340, %v340
        %vm407 = vcmp.ne.f32.partialorder %v342, %v342
        %v408 = vadd.f32 %v340, 0.0
        %v409 = vadd.f32 %v342, 0.0
        %v410 = vand.u32 2147483647, %v340
        %v411 = vand.u32 2147483647, %v342
        %v412 = vsub.f32 0.0, %v410
        %v413 = vsub.f32 0.0, %v411
        %v414 = vmul.f32 %v412, 1.442695
        %v415 = vpow.pop %v414
        %v416 = vmul.f32 %v413, 1.442695
        %v417 = vpow.pop %v416
        %v418 = vadd.f32 %v415, 1.0
        %v419 = vlog2.pop %v418
        %v420 = vmul.f32 %v419, 0.6931472
        %v421 = vmul.f32 -0.5, %v415
        %v422 = vadd.f32 %v421, 1.0
        %v423 = vmul.f32 %v422, %v415
        %v424 = vand.u32 2147483647, %v415
        %vm425 = vcmp.lt.f32.partialorder %v424, 0.0004427343
        %v426 = vsel %vm425, %v423, %v420
        %v427 = vadd.f32 %v417, 1.0
        %v428 = vlog2.pop %v427
        %v429 = vmul.f32 %v428, 0.6931472
        %v430 = vmul.f32 -0.5, %v417
        %v431 = vadd.f32 %v430, 1.0
        %v432 = vmul.f32 %v431, %v417
        %v433 = vand.u32 2147483647, %v417
        %vm434 = vcmp.lt.f32.partialorder %v433, 0.0004427343
        %v435 = vsel %vm434, %v432, %v429
        %v436 = vadd.f32 %v404, %v426
        %v437 = vadd.f32 %v405, %v435
        %v438 = vsel %vm406, %v408, %v436
        %v439 = vsel %vm407, %v409, %v437
        %v440 = vsel %vm401, %v438, 0.0
        %v441 = vsel %vm401, %v439, 0.0
        %442 = vmatprep.subr.mxu0 %v441
        %443 = vmatpush1.xpose.msra.mxu0 %v440
        %444 = vmatprep.subr.mxu0 0.0
        %445 = vmatpush1.xpose.msra.mxu0 0.0
        %446 = vmatprep.subr.mxu0 0.0
        %447 = vmatpush1.xpose.msra.mxu0 0.0
        %448 = vmatprep.subr.mxu0 0.0
        %449 = vmatpush1.xpose.msra.mxu0 0.0
        %450 = vmatprep.subr.mxu0 0.0
        %451 = vmatpush1.xpose.msra.mxu0 0.0
        %452 = vmatprep.subr.mxu0 0.0
        %453 = vmatpush1.xpose.msra.mxu0 0.0
        %454 = vmatprep.subr.mxu0 0.0
        %455 = vmatpush1.xpose.msra.mxu0 0.0
        %456 = vmatprep.subr.mxu0 0.0
        %457 = vmatpush1.xpose.msra.mxu0 0.0
        %458 = vmatprep.subr.mxu0 0.0
        %459 = vmatpush1.xpose.msra.mxu0 0.0
        %460 = vmatprep.subr.mxu0 0.0
        %461 = vmatpush1.xpose.msra.mxu0 0.0
        %462 = vmatprep.subr.mxu0 0.0
        %463 = vmatpush1.xpose.msra.mxu0 0.0
        %464 = vmatprep.subr.mxu0 0.0
        %465 = vmatpush1.xpose.msra.mxu0 0.0
        %466 = vmatprep.subr.mxu0 0.0
        %467 = vmatpush1.xpose.msra.mxu0 0.0
        %468 = vmatprep.subr.mxu0 0.0
        %469 = vmatpush1.xpose.msra.mxu0 0.0
        %470 = vmatprep.subr.mxu0 0.0
        %471 = vmatpush1.xpose.msra.mxu0 0.0
        %472 = vmatprep.subr.mxu0 0.0
        %473 = vmatpush1.xpose.msra.mxu0 0.0
        %474 = vmatprep.subr.mxu0 0.0
        %475 = vmatpush1.xpose.msra.mxu0 0.0
        %476 = vmatprep.subr.mxu0 0.0
        %477 = vmatpush1.xpose.msra.mxu0 0.0
        %478 = vmatprep.subr.mxu0 0.0
        %479 = vmatpush1.xpose.msra.mxu0 0.0
        %480 = vmatprep.subr.mxu0 0.0
        %481 = vmatpush1.xpose.msra.mxu0 0.0
        %482 = vmatprep.subr.mxu0 0.0
        %483 = vmatpush1.xpose.msra.mxu0 0.0
        %484 = vmatprep.subr.mxu0 0.0
        %485 = vmatpush1.xpose.msra.mxu0 0.0
        %486 = vmatprep.subr.mxu0 0.0
        %487 = vmatpush1.xpose.msra.mxu0 0.0
        %488 = vmatprep.subr.mxu0 0.0
        %489 = vmatpush1.xpose.msra.mxu0 0.0
        %490 = vmatprep.subr.mxu0 0.0
        %491 = vmatpush1.xpose.msra.mxu0 0.0
        %492 = vmatprep.subr.mxu0 0.0
        %493 = vmatpush1.xpose.msra.mxu0 0.0
        %494 = vmatprep.subr.mxu0 0.0
        %495 = vmatpush1.xpose.msra.mxu0 0.0
        %496 = vmatprep.subr.mxu0 0.0
        %497 = vmatpush1.xpose.msra.mxu0 0.0
        %498 = vmatprep.subr.mxu0 0.0
        %499 = vmatpush1.xpose.msra.mxu0 0.0
        %500 = vmatprep.subr.mxu0 0.0
        %501 = vmatpush1.xpose.msra.mxu0 0.0
        %502 = vmatprep.subr.mxu0 0.0
        %503 = vmatpush1.xpose.msra.mxu0 0.0
        %504 = vmatprep.subr.mxu0 0.0
        %505 = vmatpush1.xpose.msra.mxu0 0.0
        %506 = vmatprep.mubr.f32.mxu0 %v348
        %507 = vmatmul.mubr.f32.gmra.mrb[0].mxu0 %v346
        %v508 = vpop.f32.mrb[0].mxu0
        %v509 = vadd.f32 0.0, %v508
        %v510 = vpop.f32.mrb[0].mxu0
        %511 = vmatprep.mubr.f32.mxu0 %v352
        %512 = vmatmul.mubr.f32.gmra.mrb[0].mxu0 %v350
        %v513 = vpop.f32.mrb[0].mxu0
        %v514 = vadd.f32 0.0, %v513
        %v515 = vpop.f32.mrb[0].mxu0
        %516 = vmatprep.mubr.f32.mxu0 %v358
        %517 = vmatmul.mubr.f32.gmra.mrb[0].mxu0 %v356
        %v518 = vpop.f32.mrb[0].mxu0
        %v519 = vadd.f32 0.0, %v518
        %v520 = vpop.f32.mrb[0].mxu0
        %521 = vmatprep.mubr.f32.mxu0 %v362
        %522 = vmatmul.mubr.f32.gmra.mrb[0].mxu0 %v360
        %v523 = vpop.f32.mrb[0].mxu0
        %v524 = vadd.f32 0.0, %v523
        %v525 = vpop.f32.mrb[0].mxu0
        %526 = vdwg.mxu0
        %v527 = vadd.f32 %v440, %v441
        %528 = vadd.xlane.f32.xlu0 %v527
        %v529 = vpop.xlane.xlu0 %528
        %v530 = vadd.f32 %v529, 1e-06
        %v531 = vmul.f32 %v402, %v530
        %v532 = vmul.f32 %v403, %v530
        %v533 = vrot.slane %v531, 4
        %v534 = vadd.f32 %v531, %v533
        %v535 = vrot.slane %v534, 2
        %v536 = vadd.f32 %v534, %v535
        %v537 = vrot.slane %v536, 1
        %v538 = vadd.f32 %v536, %v537
        %v539 = vrot.slane %v532, 4
        %v540 = vadd.f32 %v532, %v539
        %v541 = vrot.slane %v540, 2
        %v542 = vadd.f32 %v540, %v541
        %v543 = vrot.slane %v542, 1
        %v544 = vadd.f32 %v542, %v543
        %v545 = vrcp.pop %v538
        %v546 = vrcp.pop %v544
        %v547 = vmul.f32 %v538, %v545
        %v548 = vmul.f32 %v544, %v546
        %v549 = vsub.f32 2.0, %v547
        %v550 = vsub.f32 2.0, %v548
        %v551 = vmul.f32 %v545, %v549
        %v552 = vmul.f32 %v546, %v550
        %vm553 = vcmask 64512
        %v555 = vsel %vm553, %v509, 0
        %v558 = vsel %vm553, %v514, 0
        %v561 = vsel %vm553, %v519, 0
        %v564 = vsel %vm553, %v524, 0
        %566 = vmatprep.subr.mxu0 %v403
        %567 = vmatpush1.msra.mxu0 %v402
        %568 = vmatprep.subr.mxu0 0.0
        %569 = vmatpush1.msra.mxu0 0.0
        %570 = vmatprep.subr.mxu0 0.0
        %571 = vmatpush1.msra.mxu0 0.0
        %572 = vmatprep.subr.mxu0 0.0
        %573 = vmatpush1.msra.mxu0 0.0
        %574 = vmatprep.subr.mxu0 0.0
        %575 = vmatpush1.msra.mxu0 0.0
        %576 = vmatprep.subr.mxu0 0.0
        %577 = vmatpush1.msra.mxu0 0.0
        %578 = vmatprep.subr.mxu0 0.0
        %579 = vmatpush1.msra.mxu0 0.0
        %580 = vmatprep.subr.mxu0 0.0
        %581 = vmatpush1.msra.mxu0 0.0
        %582 = vmatprep.subr.mxu0 0.0
        %583 = vmatpush1.msra.mxu0 0.0
        %584 = vmatprep.subr.mxu0 0.0
        %585 = vmatpush1.msra.mxu0 0.0
        %586 = vmatprep.subr.mxu0 0.0
        %587 = vmatpush1.msra.mxu0 0.0
        %588 = vmatprep.subr.mxu0 0.0
        %589 = vmatpush1.msra.mxu0 0.0
        %590 = vmatprep.subr.mxu0 0.0
        %591 = vmatpush1.msra.mxu0 0.0
        %592 = vmatprep.subr.mxu0 0.0
        %593 = vmatpush1.msra.mxu0 0.0
        %594 = vmatprep.subr.mxu0 0.0
        %595 = vmatpush1.msra.mxu0 0.0
        %596 = vmatprep.subr.mxu0 0.0
        %597 = vmatpush1.msra.mxu0 0.0
        %598 = vmatprep.subr.mxu0 0.0
        %599 = vmatpush1.msra.mxu0 0.0
        %600 = vmatprep.subr.mxu0 0.0
        %601 = vmatpush1.msra.mxu0 0.0
        %602 = vmatprep.subr.mxu0 0.0
        %603 = vmatpush1.msra.mxu0 0.0
        %604 = vmatprep.subr.mxu0 0.0
        %605 = vmatpush1.msra.mxu0 0.0
        %606 = vmatprep.subr.mxu0 0.0
        %607 = vmatpush1.msra.mxu0 0.0
        %608 = vmatprep.subr.mxu0 0.0
        %609 = vmatpush1.msra.mxu0 0.0
        %610 = vmatprep.subr.mxu0 0.0
        %611 = vmatpush1.msra.mxu0 0.0
        %612 = vmatprep.subr.mxu0 0.0
        %613 = vmatpush1.msra.mxu0 0.0
        %614 = vmatprep.subr.mxu0 0.0
        %615 = vmatpush1.msra.mxu0 0.0
        %616 = vmatprep.subr.mxu0 0.0
        %617 = vmatpush1.msra.mxu0 0.0
        %618 = vmatprep.subr.mxu0 0.0
        %619 = vmatpush1.msra.mxu0 0.0
        %620 = vmatprep.subr.mxu0 0.0
        %621 = vmatpush1.msra.mxu0 0.0
        %622 = vmatprep.subr.mxu0 0.0
        %623 = vmatpush1.msra.mxu0 0.0
        %624 = vmatprep.subr.mxu0 0.0
        %625 = vmatpush1.msra.mxu0 0.0
        %626 = vmatprep.subr.mxu0 0.0
        %627 = vmatpush1.msra.mxu0 0.0
        %628 = vmatprep.subr.mxu0 0.0
        %629 = vmatpush1.msra.mxu0 0.0
        %630 = vmatprep.mubr.f32.mxu0 0.0
        %631 = vmatmul.mubr.f32.gmra.mrb[0].mxu0 %v555
        %v632 = vpop.f32.mrb[0].mxu0
        %v633 = vadd.f32 0.0, %v632
        %v634 = vpop.f32.mrb[0].mxu0
        %v635 = vadd.f32 0.0, %v634
        %636 = vmatprep.mubr.f32.mxu0 0.0
        %637 = vmatmul.mubr.f32.gmra.mrb[0].mxu0 %v558
        %v638 = vpop.f32.mrb[0].mxu0
        %v639 = vadd.f32 0.0, %v638
        %v640 = vpop.f32.mrb[0].mxu0
        %v641 = vadd.f32 0.0, %v640
        %642 = vmatprep.mubr.f32.mxu0 0.0
        %643 = vmatmul.mubr.f32.gmra.mrb[0].mxu0 %v561
        %v644 = vpop.f32.mrb[0].mxu0
        %v645 = vadd.f32 0.0, %v644
        %v646 = vpop.f32.mrb[0].mxu0
        %v647 = vadd.f32 0.0, %v646
        %648 = vmatprep.mubr.f32.mxu0 0.0
        %649 = vmatmul.mubr.f32.gmra.mrb[0].mxu0 %v564
        %v650 = vpop.f32.mrb[0].mxu0
        %v651 = vadd.f32 0.0, %v650
        %v652 = vpop.f32.mrb[0].mxu0
        %v653 = vadd.f32 0.0, %v652
        %654 = vdwg.mxu0
        %v655 = vmul.f32 %v633, %v551
        %v656 = vmul.f32 %v635, %v552
        %v657 = vmul.f32 %v639, %v551
        %v658 = vmul.f32 %v641, %v552
        %v659 = vmul.f32 %v645, %v551
        %v660 = vmul.f32 %v647, %v552
        %v661 = vmul.f32 %v651, %v551
        %v662 = vmul.f32 %v653, %v552
        %v663 = vstv %s218
        %v664 = vmul.f32 %v663, %v655
        %v665 = vmul.f32 %v663, %v656
        %v666 = vmul.f32 %v663, %v657
        %v667 = vmul.f32 %v663, %v658
        %v668 = vmul.f32 %v663, %v659
        %v669 = vmul.f32 %v663, %v660
        %v670 = vmul.f32 %v663, %v661
        %v671 = vmul.f32 %v663, %v662
        %v672 = vadd.f32 %v222, %v664
        %v673 = vadd.f32 %v223, %v665
        %v674 = vadd.f32 %v224, %v666
        %v675 = vadd.f32 %v225, %v667
        %v676 = vadd.f32 %v226, %v668
        %v677 = vadd.f32 %v227, %v669
        %v678 = vadd.f32 %v228, %v670
        %v679 = vadd.f32 %v229, %v671
        %680 = vst [vmem:[%s216] sm:$0xff] %v672
        %681 = vst [vmem:[%s216 + $0x8] sm:$0xff] %v673
        %682 = vst [vmem:[%s216 + $0x10] sm:$0xff] %v674
        %683 = vst [vmem:[%s216 + $0x18] sm:$0xff] %v675
        %684 = vst [vmem:[%s216 + $0x20] sm:$0xff] %v676
        %685 = vst [vmem:[%s216 + $0x28] sm:$0xff] %v677
        %686 = vst [vmem:[%s216 + $0x30] sm:$0xff] %v678
        %687 = vst [vmem:[%s216 + $0x38] sm:$0xff] %v679
        %s688 = sand.u32 %s119, 1
        %s689 = scalar_lea.sflag [#allocation5], %s688
        %s690 = sand.u32 %s119, 1
        %s691 = smul.addr %s690, 64
        %s692 = scalar_lea.vmem [#allocation6], %s691
        // Predicated region
        $region41: #{tpu_custom_call.1} parent=35 // pred_check
          %p693 = pneg %p129
        $region42: #{tpu_custom_call.1} parent=35 // pred_check_branch
          %695 = sbr.rel (%p693) target = $region44
        $region43: #{tpu_custom_call.1} parent=35 // pred_region
          %s697 = ssub.s32 1024, 1024
          %698 = vsyncadd %s689, %s697
          %s699 = smul.addr %s22, 8
          %s700 = smul.addr %s699, 128
          %s701 = scalar_lea.hbm %s4, %s700
          %s702 = sshll.u32 %s692, 4
          %s703 = int_to_ptr.vmem [resolvable:$true] %s702
          %708 = dma.vmem_to_hbm [thread:$0]  %s703, 1024, %s701, %s689, 256, 256, 16
        $region44: #{tpu_custom_call.1} parent=35 // pred_fallthru
          _
      $region36: #{tpu_custom_call.1} parent=5 // pred_fallthru
        _
      %p709 = scmp.le.s32.totalorder 2, %s17
      // Predicated region
      $region45: #{tpu_custom_call.1} parent=5 // pred_check
        %p710 = pneg %p709
      $region46: #{tpu_custom_call.1} parent=5 // pred_check_branch
        %712 = sbr.rel (%p710) target = $region48
      $region47: #{tpu_custom_call.1} parent=5 // pred_region
        %s713 = ssub.s32 %s17, 2
        // Predicated region
        $region49: #{tpu_custom_call.1} parent=47 // pred_check
          %p714 = pneg %p135
        $region50: #{tpu_custom_call.1} parent=47 // pred_check_branch
          %716 = sbr.rel (%p714) target = $region52
        $region51: #{tpu_custom_call.1} parent=47 // pred_region
          %s717 = sand.u32 %s120, 1
          %s718 = scalar_lea.sflag [#allocation5], %s717
          %s719 = sand.u32 %s120, 1
          %s720 = smul.addr %s719, 64
          %s721 = scalar_lea.vmem [#allocation6], %s720
          %722 = dma.done %s718, 1024
        $region52: #{tpu_custom_call.1} parent=47 // pred_fallthru
          _
      $region48: #{tpu_custom_call.1} parent=5 // pred_fallthru
        _
    $region6: #{tpu_custom_call.1} parent=1 // loop_footer
      %s21 = sadd.s32 1, %s17
    $region7: #{tpu_custom_call.1} parent=1 // loop_footer_branch
      %16 = sbr.rel target = $region3
    $region8: #{tpu_custom_call.1} parent=1 // loop_exit
      _
    %723 = vsyncpa [#allocation4], 1
    %s724 = scalar_lea.sflag [#allocation4], 1
    %725 = vsyncpa %s724, 1
    %726 = vsyncpa [#allocation5], 1
    %s727 = scalar_lea.sflag [#allocation5], 1
    %728 = vsyncpa %s727, 1

</llo_original>
